<compile_context>
chip_gen: v5e
topology: v5e:2x2
jax: 0.10.0
libtpu: 0.0.40
codegen_flags: <defaults>
</compile_context>

<pallas_src>
import math

import jax
import jax.numpy as jnp
from jax import lax
from jax.experimental import pallas as pl
from jax.experimental.pallas import tpu as pltpu

_LANE = 128
_SUBLANE = 8


# ---------------------------------------------------------------------------
# Degenerate path: in_dim == out_dim == 1  ->  y = w * x + b on the VPU.
# ---------------------------------------------------------------------------
def _scalar_affine_kernel(wb_ref, x_ref, o_ref):
    # wb_ref: SMEM (2,) = [w, b];  x_ref / o_ref: (TM, 128) lane-dense slabs.
    o_ref[...] = x_ref[...] * wb_ref[0] + wb_ref[1]


def _scalar_affine_forward(x, weight, bias):
    n = x.shape[0]
    wb = jnp.concatenate([weight.reshape(-1), bias.reshape(-1)]).astype(jnp.float32)

    rows = pl.cdiv(n, _LANE)
    rows8 = ((rows + _SUBLANE - 1) // _SUBLANE) * _SUBLANE
    tm = min(512, rows8)                      # 512*128*4B = 256 KiB per buffer (fits v7x VMEM easily)
    rows_pad = ((rows8 + tm - 1) // tm) * tm

    flat = x.reshape(-1)
    flat = jnp.pad(flat, (0, rows_pad * _LANE - n))
    x2d = flat.reshape(rows_pad, _LANE)       # lane-dense, sublane-aligned

    out2d = pl.pallas_call(
        _scalar_affine_kernel,
        out_shape=jax.ShapeDtypeStruct((rows_pad, _LANE), jnp.float32),
        grid_spec=pltpu.PrefetchScalarGridSpec(
            num_scalar_prefetch=1,            # wb -> SMEM, fetched once
            grid=(rows_pad // tm,),
            in_specs=[pl.BlockSpec((tm, _LANE), lambda i, wb_s: (i, 0))],
            out_specs=pl.BlockSpec((tm, _LANE), lambda i, wb_s: (i, 0)),
        ),
        compiler_params=pltpu.CompilerParams(
            dimension_semantics=("parallel",)
        ),
    )(wb, x2d)

    return out2d.reshape(-1)[:n].reshape(n, 1)


# ---------------------------------------------------------------------------
# General path: batch-tiled MXU matmul, weight kept in (out_dim, in_dim) layout.
# ---------------------------------------------------------------------------
def _linear_kernel(x_ref, w_ref, b_ref, o_ref):
    # x_ref: (TM, in_dim); w_ref: (out_dim, in_dim); b_ref: (1, out_dim).
    acc = lax.dot_general(
        x_ref[...], w_ref[...],
        dimension_numbers=(((1,), (1,)), ((), ())),   # contract last dims: x @ W.T
        preferred_element_type=jnp.float32,
    )
    o_ref[...] = acc + b_ref[...]


def _general_linear_forward(x, weight, bias):
    n, in_dim = x.shape
    out_dim = weight.shape[0]

    n8 = ((n + _SUBLANE - 1) // _SUBLANE) * _SUBLANE
    tm = min(256, n8)                         # batch tile; weight/bias stay resident
    n_pad = ((n8 + tm - 1) // tm) * tm
    x_pad = jnp.pad(x, ((0, n_pad - n), (0, 0))) if n_pad != n else x

    out = pl.pallas_call(
        _linear_kernel,
        out_shape=jax.ShapeDtypeStruct((n_pad, out_dim), jnp.float32),
        grid_spec=pltpu.PrefetchScalarGridSpec(
            num_scalar_prefetch=0,
            grid=(n_pad // tm,),
            in_specs=[
                pl.BlockSpec((tm, in_dim), lambda i: (i, 0)),        # pipelined over batch
                pl.BlockSpec((out_dim, in_dim), lambda i: (0, 0)),   # whole weight, resident
                pl.BlockSpec((1, out_dim), lambda i: (0, 0)),        # bias, resident
            ],
            out_specs=pl.BlockSpec((tm, out_dim), lambda i: (i, 0)),
        ),
        compiler_params=pltpu.CompilerParams(
            dimension_semantics=("parallel",)
        ),
    )(x_pad, weight, bias.reshape(1, out_dim))

    return out[:n]


def linear_forward(x, weight, bias):
    """Forward of LinearRegressionModel: out = x @ weight.T + bias (torch.nn.Linear)."""
    x = jnp.asarray(x, jnp.float32)
    weight = jnp.asarray(weight, jnp.float32)
    bias = jnp.asarray(bias, jnp.float32)
    in_dim = x.shape[1]
    out_dim = weight.shape[0]
    if in_dim == 1 and out_dim == 1:
        return _scalar_affine_forward(x, weight, bias)
    return _general_linear_forward(x, weight, bias)


if __name__ == "__main__":
    # Shapes implied by the module: x is (-1, 1), nn.Linear(1, 1).
    input_dim, output_dim, batch = 1, 1, 300

    key = jax.random.PRNGKey(0)
    kx, kw, kb, kx2, kw2, kb2 = jax.random.split(key, 6)

    x = jax.random.normal(kx, (batch, input_dim), dtype=jnp.float32)
    bound = 1.0 / math.sqrt(input_dim)
    weight = jax.random.uniform(
        kw, (output_dim, input_dim), minval=-bound, maxval=bound, dtype=jnp.float32
    )
    bias = jax.random.uniform(
        kb, (output_dim,), minval=-bound, maxval=bound, dtype=jnp.float32
    )

    out = jax.block_until_ready(linear_forward(x, weight, bias))
    ref = x @ weight.T + bias
    assert out.shape == (batch, output_dim)
    assert jnp.allclose(out, ref, atol=1e-5, rtol=1e-5), "degenerate-path mismatch"

    # Also sanity-check the general (MXU) path at small, TPU-aligned dims.
    gb, gi, go = 64, 128, 128
    x2 = jax.random.normal(kx2, (gb, gi), dtype=jnp.float32)
    w2 = jax.random.normal(kw2, (go, gi), dtype=jnp.float32) * 0.05
    b2 = jax.random.normal(kb2, (go,), dtype=jnp.float32)
    out2 = jax.block_until_ready(linear_forward(x2, w2, b2))
    ref2 = x2 @ w2.T + b2
    assert out2.shape == (gb, go)
    assert jnp.allclose(out2, ref2, atol=2e-2, rtol=2e-2), "general-path mismatch"

    print("KERNEL_OK")
</pallas_src>

<mosaic_0001>
module attributes {stable_mosaic.version = 11 : i64} {
  func.func @_scalar_affine_kernel(%arg0: i32, %arg1: memref<2xf32, #tpu.memory_space<smem>>, %arg2: memref<8x128xf32, #tpu.memory_space<vmem>>, %arg3: memref<8x128xf32, #tpu.memory_space<vmem>>) attributes {dimension_semantics = [#tpu.dimension_semantics<parallel>], iteration_bounds = array<i64: 1>, scalar_prefetch = 1 : i64, scratch_operands = 0 : i64, tpu.core_type = #tpu.core_type<tc>, window_params = [{transform_indices = @transform_0, window_bounds = array<i64: 8, 128>}, {transform_indices = @transform_1, window_bounds = array<i64: 8, 128>}]} {
    %c0 = arith.constant 0 : index
    %c0_0 = arith.constant 0 : index
    %0 = vector.load %arg2[%c0, %c0_0] : memref<8x128xf32, #tpu.memory_space<vmem>>, vector<8x128xf32>
    %c0_1 = arith.constant 0 : index
    %1 = memref.load %arg1[%c0_1] : memref<2xf32, #tpu.memory_space<smem>>
    %2 = vector.broadcast %1 : f32 to vector<8x128xf32>
    %3 = arith.mulf %0, %2 : vector<8x128xf32>
    %c1 = arith.constant 1 : index
    %4 = memref.load %arg1[%c1] : memref<2xf32, #tpu.memory_space<smem>>
    %5 = vector.broadcast %4 : f32 to vector<8x128xf32>
    %6 = arith.addf %3, %5 : vector<8x128xf32>
    %c0_2 = arith.constant 0 : index
    %c0_3 = arith.constant 0 : index
    %7 = vector.load %arg3[%c0_2, %c0_3] : memref<8x128xf32, #tpu.memory_space<vmem>>, vector<8x128xf32>
    tpu.vector_store %arg3[%c0_2, %c0_3], %6 {strides = array<i32>} : memref<8x128xf32, #tpu.memory_space<vmem>>, vector<8x128xf32>,
    return
  }
  func.func @transform_0(%arg0: i32, %arg1: memref<2xf32, #tpu.memory_space<smem>>) -> (i32, i32) {
    %c0_i32 = arith.constant 0 : i32
    %c0_i32_0 = arith.constant 0 : i32
    return %arg0, %c0_i32 : i32, i32
  }
  func.func @transform_1(%arg0: i32, %arg1: memref<2xf32, #tpu.memory_space<smem>>) -> (i32, i32) {
    %c0_i32 = arith.constant 0 : i32
    %c0_i32_0 = arith.constant 0 : i32
    return %arg0, %c0_i32 : i32, i32
  }
}

</mosaic_0001>

<llo_original>
// kernel: tpu_custom_call.1
$region0: #{tpu_custom_call.1}
  #allocation0 [shape = 'u32[]', space=smem, size = 0x4, offset = 0x4, fixed_abs, tag = 'smem constant byte address 0x4 - core index']
  #allocation1 [shape = 'u32[72,128]{1,0:T(1,128)}', space=vmem, size = 0x9000, scoped, tag = 'internal scratch']
  #allocation2 [shape = 's32[1]{0}', space=sflag, size = 0x4, scoped, tag = 'scoped memory for tpu_custom_call.1']
  #allocation3 [shape = 'u8[512]{0}', space=smem, size = 0x200, scoped, tag = 'prefetched SMEM operand 0']
  %s0 = inlined_call_operand.hbm [shape: f32[2], index: 0, kind: input, shape index: {}]
  %s1 = inlined_call_operand.hbm [shape: f32[8,128], index: 1, kind: input, shape index: {}]
  %s2 = inlined_call_operand.hbm [shape: f32[8,128], index: 2, kind: output, shape index: {}]
  %s3 = sld [smem:[#allocation0]]
  $region18: #{tpu_custom_call.1} parent=0
    _
  %s5 = ssub.s32 1, %s3
  %s6 = scalar_select 0, %s5, %s3
  %s8 = sshll.u32 %s0, 4
  %s9 = int_to_ptr.hbm [resolvable:$true] %s8
  %11 = dma.hbm_to_smem %s9, 16, [#allocation3], [#allocation2]
  %13 = dma.done [#allocation2], 16
  %14 = sfence
  $region1: #{tpu_custom_call.1} parent=0
    #allocation4 [shape = 'u8[4096]{0}', space=vmem, size = 0x1000, scoped, tag = 'input window, operand 1, single buffered']
    #allocation5 [shape = 's32[1]{0}', space=sflag, size = 0x4, scoped, tag = 'scoped memory for tpu_custom_call.1']
    #allocation6 [shape = 's32[1]{0}', space=sflag, size = 0x4, scoped, tag = 'scoped memory for tpu_custom_call.1']
    #allocation7 [shape = 'u8[4096]{0}', space=vmem, size = 0x1000, scoped, tag = 'output window, operand 0, single buffered']
    %15 = vsyncpa [#allocation5], 0
    %16 = vsyncpa [#allocation6], 0
    // Predicated region
    $region2: #{tpu_custom_call.1} parent=1 // pred_check
      _
    $region3: #{tpu_custom_call.1} parent=1 // pred_check_branch
      %18 = sbr.rel (0) target = $region5
    $region4: #{tpu_custom_call.1} parent=1 // pred_region
      %20 = vsyncadd [#allocation5], 0
      %s22 = sshll.u32 %s1, 4
      %s23 = int_to_ptr.hbm [resolvable:$true] %s22
      %s24 = sshll.u32 [#allocation4], 4
      %s25 = int_to_ptr.vmem [resolvable:$true] %s24
      %27 = dma.hbm_to_vmem [thread:$0]  %s23, 128, %s25, [#allocation5]
    $region5: #{tpu_custom_call.1} parent=1 // pred_fallthru
      _
    // Predicated region
    $region6: #{tpu_custom_call.1} parent=1 // pred_check
      _
    $region7: #{tpu_custom_call.1} parent=1 // pred_check_branch
      %29 = sbr.rel (0) target = $region9
    $region8: #{tpu_custom_call.1} parent=1 // pred_region
      %31 = dma.done [#allocation5], 128
    $region9: #{tpu_custom_call.1} parent=1 // pred_fallthru
      _
    %v32 = vld [vmem:[#allocation4] sm:$0xff]
    %s33 = sld [smem:[#allocation3]]
    %v34 = vstv %s33
    %v35 = vmul.f32 %v32, %v34
    %s36 = sld [smem:[#allocation3 + $0x1]]
    %v37 = vstv %s36
    %v38 = vadd.f32 %v35, %v37
    %39 = vst [vmem:[#allocation7] sm:$0xff] %v38
    // Predicated region
    $region10: #{tpu_custom_call.1} parent=1 // pred_check
      _
    $region11: #{tpu_custom_call.1} parent=1 // pred_check_branch
      %41 = sbr.rel (0) target = $region13
    $region12: #{tpu_custom_call.1} parent=1 // pred_region
      %43 = vsyncadd [#allocation6], 0
      %s45 = sshll.u32 [#allocation7], 4
      %s46 = int_to_ptr.vmem [resolvable:$true] %s45
      %s47 = sshll.u32 %s2, 4
      %s48 = int_to_ptr.hbm [resolvable:$true] %s47
      %50 = dma.vmem_to_hbm [thread:$0]  %s46, 128, %s48, [#allocation6]
    $region13: #{tpu_custom_call.1} parent=1 // pred_fallthru
      _
    // Predicated region
    $region14: #{tpu_custom_call.1} parent=1 // pred_check
      _
    $region15: #{tpu_custom_call.1} parent=1 // pred_check_branch
      %52 = sbr.rel (0) target = $region17
    $region16: #{tpu_custom_call.1} parent=1 // pred_region
      %54 = dma.done [#allocation6], 128
    $region17: #{tpu_custom_call.1} parent=1 // pred_fallthru
      _
    %55 = vsyncpa [#allocation5], 1
    %56 = vsyncpa [#allocation6], 1

</llo_original>
